<compile_context>
chip_gen: v7x
topology: tpu7x:2x2x1
jax: 0.10.0
libtpu: 0.0.40
codegen_flags: <defaults>
</compile_context>

<pallas_src>
import functools

import jax
import jax.numpy as jnp
from jax.experimental import pallas as pl
from jax.experimental.pallas import tpu as pltpu

TARGET_TILE_BYTES = 8 << 20        # ~8 MiB per tile; in+out double-buffered ~ 32 MiB live
RAGGED_BLOCK_LANES = 128 * 1024    # lane-block size (elements) for the (1, n) ragged path
VMEM_LIMIT_BYTES = 48 << 20        # < 64 MiB physical on v7x, ample on v5e/v6e (128 MiB)
SMALL_BYTES = 512 << 10            # below this, single-block fast path


def _exp_weight_kernel(g_ref, o_ref, *, neg_mult, neg_shift, compute_dtype):
    # out = exp(gamma * (-multiplier) + (-shift)); exp -> EUP, mul/add -> VPU.
    g = g_ref[...].astype(compute_dtype)
    y = g * neg_mult
    if neg_shift != 0.0:           # skip the add entirely when shift == 0
        y = y + neg_shift
    o_ref[...] = jnp.exp(y).astype(o_ref.dtype)


def _round_up(x: int, m: int) -> int:
    return ((x + m - 1) // m) * m


def _pick_lanes(n: int):
    for cand in (1024, 512, 256, 128):
        if n % cand == 0:
            return cand
    return None


def _compute_dtype(dtype):
    # f32 math by default; bf16-native mul/add/exp only where VPU/EUP are bf16-capable.
    if dtype == jnp.bfloat16:
        try:
            kind = jax.devices()[0].device_kind.lower()
        except Exception:
            kind = ""
        if "v6" in kind or "v7" in kind:
            return jnp.bfloat16
    return jnp.float32


def _run(slab, block_shape, grid, index_map, kernel, out_dtype, donate_input):
    call_kwargs = {}
    if donate_input:
        # Same shape/dtype in and out -> alias; saves one HBM output allocation.
        call_kwargs["input_output_aliases"] = {0: 0}
    return pl.pallas_call(
        kernel,
        out_shape=jax.ShapeDtypeStruct(slab.shape, out_dtype),
        grid_spec=pltpu.PrefetchScalarGridSpec(
            num_scalar_prefetch=0,
            grid=grid,
            in_specs=[pl.BlockSpec(block_shape, index_map)],
            out_specs=pl.BlockSpec(block_shape, index_map),
        ),
        compiler_params=pltpu.CompilerParams(
            dimension_semantics=("parallel",) * len(grid),
            vmem_limit_bytes=VMEM_LIMIT_BYTES,
        ),
        **call_kwargs,
    )(slab)


def exponential_weighting(gamma: jax.Array,
                          multiplier: float = 0.5,
                          shift: float = 0.0,
                          donate_input: bool = False) -> jax.Array:
    """Pallas TPU implementation of ExponentialWeighting.forward."""
    orig_shape = gamma.shape
    orig_dtype = gamma.dtype
    n = int(gamma.size)
    if n == 0:
        return gamma

    itemsize = jnp.dtype(orig_dtype).itemsize
    sub = max(8, 32 // itemsize)  # sublane multiple: 8 f32 / 16 bf16 / 32 int8
    compute_dtype = _compute_dtype(orig_dtype)

    kernel = functools.partial(
        _exp_weight_kernel,
        neg_mult=float(-multiplier),
        neg_shift=float(-shift),
        compute_dtype=compute_dtype)

    flat = gamma.reshape(-1)       # contiguous reshape: metadata-only, no HBM pass
    lanes = _pick_lanes(n)

    # --- Small-input fast path: one block == whole array, no (8,128) constraint, no pad.
    if n * itemsize <= SMALL_BYTES:
        slab = flat.reshape(n // lanes, lanes) if lanes is not None else flat.reshape(1, n)
        out = _run(slab, slab.shape, (1,), lambda i: (0, 0), kernel, orig_dtype,
                   donate_input)
        return out.reshape(orig_shape)

    # --- Large, lane-divisible: dense 2-D slab, ~8 MiB row tiles, grid >= 2 blocks.
    if lanes is not None:
        rows = n // lanes
        slab = flat.reshape(rows, lanes)
        target_rows = max(sub, (TARGET_TILE_BYTES // (lanes * itemsize)) // sub * sub)
        tile_rows = min(target_rows, _round_up(rows, sub))
        if tile_rows >= rows:
            # Force at least 2 blocks so the "parallel" grid axis can shard across both
            # v7x TensorCores; also keeps every block within the array's leading dim.
            tile_rows = max(sub, _round_up(pl.cdiv(rows, 2), sub))
        grid = (pl.cdiv(rows, tile_rows),)
        out = _run(slab, (tile_rows, lanes), grid, lambda i: (i, 0), kernel,
                   orig_dtype, donate_input)
        return out.reshape(orig_shape)

    # --- Large, ragged (n % 128 != 0): view as (1, n), tile the lane axis; Pallas masks
    # the out-of-bounds tail of the final block -> no pad-concatenate / output-slice
    # HBM round trips (the old path paid ~3x HBM traffic here).
    slab = flat.reshape(1, n)
    block_lanes = min(RAGGED_BLOCK_LANES, _round_up(n, 128))
    grid = (pl.cdiv(n, block_lanes),)
    out = _run(slab, (1, block_lanes), grid, lambda i: (0, i), kernel,
               orig_dtype, donate_input)
    return out.reshape(orig_shape)


if __name__ == "__main__":
    key = jax.random.PRNGKey(0)
    k1, k2, k3, k4 = jax.random.split(key, 4)

    # 1) Typical small gamma: small-input single-block fast path ((2,1024) slab).
    gamma = jax.random.normal(k1, (2, 4, 16, 16), dtype=jnp.float32)
    out = jax.block_until_ready(exponential_weighting(gamma, multiplier=0.5, shift=0.0))
    ref = jnp.exp(-gamma * 0.5 - 0.0)
    assert out.shape == gamma.shape and out.dtype == gamma.dtype
    assert jnp.allclose(out, ref, rtol=1e-5, atol=1e-6)

    # 2) Ragged small input + nonzero shift: single (1, n) block, no padding copy.
    gamma2 = jax.random.normal(k2, (7, 11, 13), dtype=jnp.float32)
    out2 = jax.block_until_ready(exponential_weighting(gamma2, multiplier=0.25, shift=1.5))
    ref2 = jnp.exp(-gamma2 * 0.25 - 1.5)
    assert out2.shape == gamma2.shape and out2.dtype == gamma2.dtype
    assert jnp.allclose(out2, ref2, rtol=1e-5, atol=1e-6)

    # 3) Large lane-divisible input: tiled dense path, grid forced to >= 2 blocks.
    gamma3 = jax.random.normal(k3, (512, 1024), dtype=jnp.float32)
    out3 = jax.block_until_ready(exponential_weighting(gamma3, multiplier=0.5, shift=0.0))
    ref3 = jnp.exp(-gamma3 * 0.5)
    assert jnp.allclose(out3, ref3, rtol=1e-5, atol=1e-6)

    # 4) Large ragged input: (1, n) lane-tiled path with masked final block.
    gamma4 = jax.random.normal(k4, (150001,), dtype=jnp.float32)
    out4 = jax.block_until_ready(exponential_weighting(gamma4, multiplier=0.5, shift=0.25))
    ref4 = jnp.exp(-gamma4 * 0.5 - 0.25)
    assert jnp.allclose(out4, ref4, rtol=1e-5, atol=1e-6)

    print("KERNEL_OK")
</pallas_src>

<mosaic_0001>
module attributes {stable_mosaic.version = 11 : i64} {
  func.func @_exp_weight_kernel(%arg0: i32, %arg1: memref<2x1024xf32, #tpu.memory_space<vmem>>, %arg2: memref<2x1024xf32, #tpu.memory_space<vmem>>) attributes {dimension_semantics = [#tpu.dimension_semantics<parallel>], iteration_bounds = array<i64: 1>, scalar_prefetch = 0 : i64, scratch_operands = 0 : i64, tpu.core_type = #tpu.core_type<tc>, window_params = [{pipeline_mode = #tpu.pipeline_mode<synchronous>, transform_indices = @transform_0, window_bounds = array<i64: 2, 1024>}, {pipeline_mode = #tpu.pipeline_mode<synchronous>, transform_indices = @transform_1, window_bounds = array<i64: 2, 1024>}]} {
    %c0 = arith.constant 0 : index
    %c0_0 = arith.constant 0 : index
    %0 = vector.load %arg1[%c0, %c0_0] : memref<2x1024xf32, #tpu.memory_space<vmem>>, vector<2x1024xf32>
    %cst = arith.constant -5.000000e-01 : f32
    %1 = vector.broadcast %cst : f32 to vector<2x1024xf32>
    %2 = arith.mulf %0, %1 : vector<2x1024xf32>
    %3 = math.exp %2 : vector<2x1024xf32>
    %c0_1 = arith.constant 0 : index
    %c0_2 = arith.constant 0 : index
    %4 = vector.load %arg2[%c0_1, %c0_2] : memref<2x1024xf32, #tpu.memory_space<vmem>>, vector<2x1024xf32>
    tpu.vector_store %arg2[%c0_1, %c0_2], %3 {strides = array<i32>} : memref<2x1024xf32, #tpu.memory_space<vmem>>, vector<2x1024xf32>,
    return
  }
  func.func @transform_0(%arg0: i32) -> (i32, i32) {
    %c0_i32 = arith.constant 0 : i32
    %c0_i32_0 = arith.constant 0 : i32
    %c0_i32_1 = arith.constant 0 : i32
    return %c0_i32, %c0_i32_0 : i32, i32
  }
  func.func @transform_1(%arg0: i32) -> (i32, i32) {
    %c0_i32 = arith.constant 0 : i32
    %c0_i32_0 = arith.constant 0 : i32
    %c0_i32_1 = arith.constant 0 : i32
    return %c0_i32, %c0_i32_0 : i32, i32
  }
}

</mosaic_0001>

<llo_original>
// kernel: tpu_custom_call.1
$region0: #{tpu_custom_call.1}
  #allocation0 [shape = 'u32[]', space=smem, size = 0x4, offset = 0x4, fixed_abs, tag = 'smem constant byte address 0x4 - core index']
  #allocation1 [shape = 'u32[144,128]{1,0:T(1,128)}', space=vmem, size = 0x12000, scoped, tag = 'internal scratch']
  %s0 = inlined_call_operand.hbm [shape: f32[2,1024], index: 0, kind: input, shape index: {}]
  %s1 = inlined_call_operand.hbm [shape: f32[2,1024], index: 1, kind: output, shape index: {}]
  %s2 = sld [smem:[#allocation0]]
  $region18: #{tpu_custom_call.1} parent=0
    _
  %s4 = ssub.s32 1, %s2
  %s5 = scalar_select 0, %s4, %s2
  $region1: #{tpu_custom_call.1} parent=0
    #allocation2 [shape = 'u8[8192]{0}', space=vmem, size = 0x2000, scoped, tag = 'input window, operand 0, single buffered']
    #allocation3 [shape = 's32[1]{0}', space=sflag, size = 0x4, scoped, tag = 'scoped memory for tpu_custom_call.1']
    #allocation4 [shape = 's32[1]{0}', space=sflag, size = 0x4, scoped, tag = 'scoped memory for tpu_custom_call.1']
    #allocation5 [shape = 'u8[8192]{0}', space=vmem, size = 0x2000, scoped, tag = 'output window, operand 0, single buffered']
    %6 = vsyncpa [#allocation3], 0
    %7 = vsyncpa [#allocation4], 0
    // Predicated region
    $region2: #{tpu_custom_call.1} parent=1 // pred_check
      _
    $region3: #{tpu_custom_call.1} parent=1 // pred_check_branch
      %9 = sbr.rel (0) target = $region5
    $region4: #{tpu_custom_call.1} parent=1 // pred_region
      %s11 = ssub.s32 256, 256
      %12 = vsyncadd [#allocation3], %s11
      %s14 = sshll.u32 [#allocation2], 4
      %s15 = int_to_ptr.vmem [resolvable:$true] %s14
      %17 = dma.hbm_to_vmem [thread:$0]  %s0, 256, %s15, [#allocation3]
    $region5: #{tpu_custom_call.1} parent=1 // pred_fallthru
      _
    // Predicated region
    $region6: #{tpu_custom_call.1} parent=1 // pred_check
      _
    $region7: #{tpu_custom_call.1} parent=1 // pred_check_branch
      %19 = sbr.rel (0) target = $region9
    $region8: #{tpu_custom_call.1} parent=1 // pred_region
      %20 = dma.done [#allocation3], 256
    $region9: #{tpu_custom_call.1} parent=1 // pred_fallthru
      _
    %v21 = vld [vmem:[#allocation2] sm:$0xff]
    %v22 = vld [vmem:[#allocation2 + $0x8] sm:$0xff]
    %v23 = vmul.f32 %v21, -0.5
    %v24 = vmul.f32 %v22, -0.5
    %v25 = vmul.f32 %v23, 1.442695
    %v26 = vpow.pop %v25
    %v27 = vmul.f32 %v24, 1.442695
    %v28 = vpow.pop %v27
    %29 = vst [vmem:[#allocation5] sm:$0xff] %v26
    %30 = vst [vmem:[#allocation5 + $0x8] sm:$0xff] %v28
    // Predicated region
    $region10: #{tpu_custom_call.1} parent=1 // pred_check
      _
    $region11: #{tpu_custom_call.1} parent=1 // pred_check_branch
      %32 = sbr.rel (0) target = $region13
    $region12: #{tpu_custom_call.1} parent=1 // pred_region
      %s34 = ssub.s32 256, 256
      %35 = vsyncadd [#allocation4], %s34
      %s37 = sshll.u32 [#allocation5], 4
      %s38 = int_to_ptr.vmem [resolvable:$true] %s37
      %40 = dma.vmem_to_hbm [thread:$0]  %s38, 256, %s1, [#allocation4]
    $region13: #{tpu_custom_call.1} parent=1 // pred_fallthru
      _
    // Predicated region
    $region14: #{tpu_custom_call.1} parent=1 // pred_check
      _
    $region15: #{tpu_custom_call.1} parent=1 // pred_check_branch
      %42 = sbr.rel (0) target = $region17
    $region16: #{tpu_custom_call.1} parent=1 // pred_region
      %43 = dma.done [#allocation4], 256
    $region17: #{tpu_custom_call.1} parent=1 // pred_fallthru
      _
    %44 = vsyncpa [#allocation3], 1
    %45 = vsyncpa [#allocation4], 1

</llo_original>
